<compile_context>
chip_gen: v5e
topology: v5e:2x2
jax: 0.10.0
libtpu: 0.0.40
codegen_flags: <defaults>
</compile_context>

<pallas_src>
import math

import jax
import jax.numpy as jnp
from jax.experimental import pallas as pl
from jax.experimental.pallas import tpu as pltpu

_LANES = 128
_MAX_OUTSTANDING_COPIES = 8       # a handful of DMAs in flight
_MIN_CHUNK_BYTES = 512 * 1024     # don't bother splitting tiny copies


def _make_flatten_dma_kernel(row_chunks):
    """Build an identity-copy kernel issuing one HBM->HBM DMA per row chunk.

    `row_chunks` is a static tuple of (start_row, num_rows) covering every row
    of the slab exactly once.  All chunk boundaries are Python ints, so every
    pl.ds below is a static, zero-cost slice, and every chunk (whole rows of a
    row-major 2-D slab) is one contiguous HBM byte range.
    """
    def kernel(x_ref, o_ref, sem):
        copies = []
        for i, (start, size) in enumerate(row_chunks):
            cp = pltpu.make_async_copy(
                x_ref.at[pl.ds(start, size)],
                o_ref.at[pl.ds(start, size)],
                sem.at[i],
            )
            cp.start()
            copies.append(cp)
        # All copies are in flight; now wait for completion.
        for cp in copies:
            cp.wait()

    return kernel


def flatten_pallas(x: jax.Array) -> jax.Array:
    """Pallas equivalent of torch Flatten: (N, ...) -> (N, prod(...))."""
    n = x.shape[0]
    feat = math.prod(x.shape[1:])
    total = n * feat

    # Degenerate case: nothing to copy.
    if total == 0:
        return jnp.reshape(x, (n, feat))

    # The actual flatten (metadata-only; matches torch .view row-major order).
    x_flat = jnp.reshape(x, (n, feat))

    # Pick a 2-D slab view whose rows we chunk.  Row-major reshape is
    # metadata-only, so when the batch is small but the element count is
    # lane-divisible we use a (total/128, 128) view purely to expose more row
    # granularity for chunking.  No padding in either case.
    if n >= _MAX_OUTSTANDING_COPIES or total % _LANES != 0:
        slab_shape = (n, feat)
    else:
        slab_shape = (total // _LANES, _LANES)
    slab = jnp.reshape(x_flat, slab_shape)
    rows = slab_shape[0]

    # Split rows into a few contiguous chunks so several DMAs are outstanding
    # at once, but never below ~512 KiB per chunk (per-DMA overhead).
    itemsize = jnp.dtype(x.dtype).itemsize
    total_bytes = total * itemsize
    num_chunks = max(
        1, min(rows, _MAX_OUTSTANDING_COPIES, total_bytes // _MIN_CHUNK_BYTES)
    )
    base, rem = divmod(rows, num_chunks)
    row_chunks = []
    start = 0
    for i in range(num_chunks):
        size = base + (1 if i < rem else 0)
        if size:
            row_chunks.append((start, size))
            start += size

    out = pl.pallas_call(
        _make_flatten_dma_kernel(tuple(row_chunks)),
        out_shape=jax.ShapeDtypeStruct(slab_shape, x.dtype),
        in_specs=[pl.BlockSpec(memory_space=pl.ANY)],   # stay in HBM, no auto-DMA
        out_specs=pl.BlockSpec(memory_space=pl.ANY),    # stay in HBM, no auto-DMA
        scratch_shapes=[pltpu.SemaphoreType.DMA((len(row_chunks),))],
    )(slab)

    return jnp.reshape(out, (n, feat))


if __name__ == "__main__":
    key = jax.random.PRNGKey(0)
    # Small NCHW input consistent with a conv-net feature map.
    x = jax.random.normal(key, (2, 4, 16, 16), dtype=jnp.float32)

    flatten = jax.jit(flatten_pallas)
    y = flatten(x)
    y = jax.block_until_ready(y)

    # Reference: torch x.view(x.size(0), -1) == row-major reshape.
    y_ref = jnp.reshape(x, (x.shape[0], -1))

    assert y.shape == (2, 4 * 16 * 16), y.shape
    assert y.dtype == x.dtype
    assert bool(jnp.all(y == y_ref))

    print("KERNEL_OK")
</pallas_src>

<mosaic_0001>
module attributes {stable_mosaic.version = 11 : i64} {
  func.func @kernel(%arg0: memref<16x128xf32, #tpu.memory_space<any>>, %arg1: memref<16x128xf32, #tpu.memory_space<any>>, %arg2: memref<1x!tpu.dma_semaphore, #tpu.memory_space<semaphore_mem>>) attributes {dimension_semantics = [], scalar_prefetch = 0 : i64, scratch_operands = 1 : i64, tpu.core_type = #tpu.core_type<tc>} {
    %c0_i32 = arith.constant 0 : i32
    %c0_i32_0 = arith.constant 0 : i32
    %c0_i32_1 = arith.constant 0 : i32
    %0 = tpu.memref_slice %arg0[%c0_i32_0, %c0_i32_1] : memref<16x128xf32, #tpu.memory_space<any>> -> memref<16x128xf32, #tpu.memory_space<any>>
    %c0_i32_2 = arith.constant 0 : i32
    %c0_i32_3 = arith.constant 0 : i32
    %1 = tpu.memref_slice %arg1[%c0_i32_2, %c0_i32_3] : memref<16x128xf32, #tpu.memory_space<any>> -> memref<16x128xf32, #tpu.memory_space<any>>
    %2 = tpu.memref_slice %arg2[%c0_i32] : memref<1x!tpu.dma_semaphore, #tpu.memory_space<semaphore_mem>> -> memref<1x!tpu.dma_semaphore, #tpu.memory_space<semaphore_mem>>
    %3 = tpu.memref_squeeze %2 : memref<1x!tpu.dma_semaphore, #tpu.memory_space<semaphore_mem>> -> memref<!tpu.dma_semaphore, #tpu.memory_space<semaphore_mem>>
    tpu.enqueue_dma source(%0 : memref<16x128xf32, #tpu.memory_space<any>>) target(%1 : memref<16x128xf32, #tpu.memory_space<any>>) target_semaphore(%3 : memref<!tpu.dma_semaphore, #tpu.memory_space<semaphore_mem>>)
    %c0_i32_4 = arith.constant 0 : i32
    %c0_i32_5 = arith.constant 0 : i32
    %c0_i32_6 = arith.constant 0 : i32
    %4 = tpu.memref_slice %arg0[%c0_i32_5, %c0_i32_6] : memref<16x128xf32, #tpu.memory_space<any>> -> memref<16x128xf32, #tpu.memory_space<any>>
    %c0_i32_7 = arith.constant 0 : i32
    %c0_i32_8 = arith.constant 0 : i32
    %5 = tpu.memref_slice %arg1[%c0_i32_7, %c0_i32_8] : memref<16x128xf32, #tpu.memory_space<any>> -> memref<16x128xf32, #tpu.memory_space<any>>
    %6 = tpu.memref_slice %arg2[%c0_i32_4] : memref<1x!tpu.dma_semaphore, #tpu.memory_space<semaphore_mem>> -> memref<1x!tpu.dma_semaphore, #tpu.memory_space<semaphore_mem>>
    %7 = tpu.memref_squeeze %6 : memref<1x!tpu.dma_semaphore, #tpu.memory_space<semaphore_mem>> -> memref<!tpu.dma_semaphore, #tpu.memory_space<semaphore_mem>>
    tpu.wait_dma2 semaphore(%7 : memref<!tpu.dma_semaphore, #tpu.memory_space<semaphore_mem>>) src(%4 : memref<16x128xf32, #tpu.memory_space<any>>) dst(%5 : memref<16x128xf32, #tpu.memory_space<any>>)
    return
  }
}

</mosaic_0001>

<llo_original>
// kernel: flatten_pallas.1
$region0: #{flatten_pallas.1}
  #allocation0 [shape = 'u32[]', space=smem, size = 0x4, offset = 0x4, fixed_abs, tag = 'smem constant byte address 0x4 - core index']
  #allocation1 [shape = 'u32[72,128]{1,0:T(1,128)}', space=vmem, size = 0x9000, scoped, tag = 'internal scratch']
  #allocation2 [shape = 's32[1]{0}', space=sflag, size = 0x4, scoped, tag = 'scratch operand']
  #allocation3 [shape = 's32[]', space=sflag, size = 0x4, offset = 0, fixed_abs, tag = 'sflag constant byte address 0x0 - dummy sync flag']
  %s0 = inlined_call_operand.vmem [shape: f32[16,128], index: 0, kind: input, shape index: {}]
  %s1 = inlined_call_operand.vmem [shape: f32[16,128], index: 1, kind: output, shape index: {}]
  %s2 = sld [smem:[#allocation0]]
  $region21: #{flatten_pallas.1} parent=0
    _
  %s4 = ssub.s32 1, %s2
  %s5 = scalar_select 0, %s4, %s2
  // Predicated region
  $region2: #{flatten_pallas.1} parent=0 // pred_check
    _
  $region3: #{flatten_pallas.1} parent=0 // pred_check_branch
    %7 = sbr.rel (0) target = $region5
  $region4: #{flatten_pallas.1} parent=0 // pred_region
    loop: start=0, step=1, limit=1
    $region6: #{flatten_pallas.1} parent=4 // loop_pre_header
      _
    $region7: #{flatten_pallas.1} parent=4 // loop_header
      %s9 = sphi 0, %s13
      %p10 = scmp.ge.s32.totalorder %s9, 1
      %s14 = sphi %s0, %s0
      %s15 = sphi %s1, %s1
    $region8: #{flatten_pallas.1} parent=4 // loop_header_branch
      %12 = sbr.rel (%p10) target = $region12
    $region9: #{flatten_pallas.1} parent=4 // loop_body
      %v16 = vld [vmem:[%s14] sm:$0xff]
      %17 = vst [vmem:[%s15] sm:$0xff] %v16
      %v18 = vld [vmem:[%s14 + $0x8] sm:$0xff]
      %19 = vst [vmem:[%s15 + $0x8] sm:$0xff] %v18
    $region10: #{flatten_pallas.1} parent=4 // loop_footer
      %s13 = sadd.s32 1, %s9
    $region11: #{flatten_pallas.1} parent=4 // loop_footer_branch
      %8 = sbr.rel target = $region7
    $region12: #{flatten_pallas.1} parent=4 // loop_exit
      _
  $region5: #{flatten_pallas.1} parent=0 // pred_fallthru
    _
  // Predicated region
  $region13: #{flatten_pallas.1} parent=0 // pred_check
    _
  $region14: #{flatten_pallas.1} parent=0 // pred_check_branch
    %21 = sbr.rel target = $region16
  $region15: #{flatten_pallas.1} parent=0 // pred_region
    _
  $region16: #{flatten_pallas.1} parent=0 // pred_fallthru
    _
  // Predicated region
  $region17: #{flatten_pallas.1} parent=0 // pred_check
    _
  $region18: #{flatten_pallas.1} parent=0 // pred_check_branch
    %24 = sbr.rel (0) target = $region20
  $region19: #{flatten_pallas.1} parent=0 // pred_region
    %25 = vsyncadd [#allocation2], 256
  $region20: #{flatten_pallas.1} parent=0 // pred_fallthru
    _
  %s26 = smul.u32 16, 1
  %s27 = sshll.u32 %s26, 4
  %28 = dma.done [#allocation2], %s27
  %29 = vsyncmov [#allocation2]
  %s30 = vpop.sfrf %29
  %p31 = scmp.eq.s32.totalorder %s30, 0
  %p32 = pneg %p31
  %34 = shalt.err (%p32)

</llo_original>
